<compile_context>
chip_gen: v5e
topology: v5e:2x2
jax: 0.10.0
libtpu: 0.0.40
codegen_flags: <defaults>
</compile_context>

<pallas_src>
import jax
import jax.numpy as jnp
from jax import lax
from jax.experimental import pallas as pl
from jax.experimental.pallas import tpu as pltpu


def _ensemble_kernel(x_ref, w_ref, b_ref, o_ref):
    """Single-shot ensemble: everything VMEM-resident, one MXU matmul.

    x_ref: [B, D]            (f32)
    w_ref: [M, O, D]         lane-dense: D on the 128-lane axis
    b_ref: [M, O]
    o_ref: [B, O]
    """
    n_models = w_ref.shape[0]           # static
    inv_m = 1.0 / n_models              # static Python scalar

    # sum_i W_i : reduction over the leading (untiled) axis -> cheap VPU adds.
    w_sum = jnp.sum(w_ref[...], axis=0)                    # [O, D]
    # sum_i b_i : keep 2-D for a clean broadcast (no rank-1 intermediates).
    b_sum = jnp.sum(b_ref[...], axis=0, keepdims=True)     # [1, O]

    # sum_i (x @ W_i) == x @ sum_i(W_i): single MXU matmul contracting D on
    # the last dim of both operands (no transpose materialized).
    xw = lax.dot_general(
        x_ref[...], w_sum,
        dimension_numbers=(((1,), (1,)), ((), ())),
        preferred_element_type=jnp.float32,
    )                                                       # [B, O]

    o_ref[...] = ((xw + b_sum) * inv_m).astype(o_ref.dtype)


def average_ensemble(x_nchw, weights, biases):
    """x_nchw: [B, C, H, W]; weights: [M, D, O]; biases: [M, O] -> [B, O]."""
    B = x_nchw.shape[0]
    D = x_nchw.shape[1] * x_nchw.shape[2] * x_nchw.shape[3]
    M, Dw, O = weights.shape
    assert Dw == D

    x_flat = x_nchw.reshape(B, D)                    # glue reshape in plain JAX
    w_lane_dense = jnp.transpose(weights, (0, 2, 1))  # [M, O, D]: D on lanes

    return pl.pallas_call(
        _ensemble_kernel,
        out_shape=jax.ShapeDtypeStruct((B, O), jnp.float32),
        # No grid: whole arrays live in VMEM for the single kernel invocation.
        in_specs=[
            pl.BlockSpec(memory_space=pltpu.MemorySpace.VMEM),  # x      [B, D]
            pl.BlockSpec(memory_space=pltpu.MemorySpace.VMEM),  # W      [M, O, D]
            pl.BlockSpec(memory_space=pltpu.MemorySpace.VMEM),  # b      [M, O]
        ],
        out_specs=pl.BlockSpec(memory_space=pltpu.MemorySpace.VMEM),
    )(x_flat, w_lane_dense, biases)


if __name__ == "__main__":
    # Small shapes consistent with the module: outshape=3, NCHW input.
    B, C, H, W = 2, 4, 16, 16
    D = C * H * W
    M = 3          # number of ensemble members
    O = 3          # outshape

    key = jax.random.PRNGKey(0)
    kx, kw, kb = jax.random.split(key, 3)

    x = jax.random.normal(kx, (B, C, H, W), dtype=jnp.float32)
    weights = jax.random.normal(kw, (M, D, O), dtype=jnp.float32) * 0.02
    biases = jax.random.normal(kb, (M, O), dtype=jnp.float32) * 0.1

    out = average_ensemble(x, weights, biases)
    out = jax.block_until_ready(out)

    # Pure-JAX reference: mean over models of (x_flat @ W_i + b_i)
    x_flat = x.reshape(B, D)
    ref = jnp.mean(
        jnp.einsum("bd,mdo->mbo", x_flat, weights) + biases[:, None, :], axis=0
    )

    assert out.shape == (B, O)
    assert jnp.allclose(out, ref, atol=1e-4, rtol=1e-4), (out, ref)
    print("KERNEL_OK")
</pallas_src>

<mosaic_0001>
module attributes {stable_mosaic.version = 11 : i64} {
  func.func @_ensemble_kernel(%arg0: memref<2x1024xf32, #tpu.memory_space<vmem>>, %arg1: memref<3x3x1024xf32, #tpu.memory_space<vmem>>, %arg2: memref<3x3xf32, #tpu.memory_space<vmem>>, %arg3: memref<2x3xf32, #tpu.memory_space<vmem>>) attributes {dimension_semantics = [], scalar_prefetch = 0 : i64, scratch_operands = 0 : i64, tpu.core_type = #tpu.core_type<tc>} {
    %c0 = arith.constant 0 : index
    %c0_0 = arith.constant 0 : index
    %c0_1 = arith.constant 0 : index
    %0 = vector.load %arg1[%c0, %c0_0, %c0_1] : memref<3x3x1024xf32, #tpu.memory_space<vmem>>, vector<3x3x1024xf32>
    %cst = arith.constant dense<0.000000e+00> : vector<3x1024xf32>
    %1 = vector.multi_reduction <add>, %0, %cst [0] : vector<3x3x1024xf32> to vector<3x1024xf32>
    %c0_2 = arith.constant 0 : index
    %c0_3 = arith.constant 0 : index
    %2 = vector.load %arg2[%c0_2, %c0_3] : memref<3x3xf32, #tpu.memory_space<vmem>>, vector<3x3xf32>
    %cst_4 = arith.constant dense<0.000000e+00> : vector<3xf32>
    %3 = vector.multi_reduction <add>, %2, %cst_4 [0] : vector<3x3xf32> to vector<3xf32>
    %4 = vector.shape_cast %3 : vector<3xf32> to vector<1x3xf32>
    %c0_5 = arith.constant 0 : index
    %c0_6 = arith.constant 0 : index
    %5 = vector.load %arg0[%c0_5, %c0_6] : memref<2x1024xf32, #tpu.memory_space<vmem>>, vector<2x1024xf32>
    %cst_7 = arith.constant dense<0.000000e+00> : vector<2x3xf32>
    %6 = tpu.matmul %5, %1, %cst_7 {dimension_numbers = #tpu.dot_dimension_numbers<[1], [1], [0], [0], [0, 0, 1, 0], [], []>} : vector<2x1024xf32>, vector<3x1024xf32>, vector<2x3xf32> -> vector<2x3xf32>
    %7 = vector.broadcast %4 : vector<1x3xf32> to vector<2x3xf32>
    %8 = arith.addf %6, %7 : vector<2x3xf32>
    %cst_8 = arith.constant 0.333333343 : f32
    %9 = vector.broadcast %cst_8 : f32 to vector<2x3xf32>
    %10 = arith.mulf %8, %9 : vector<2x3xf32>
    %c0_9 = arith.constant 0 : index
    %c0_10 = arith.constant 0 : index
    %11 = vector.load %arg3[%c0_9, %c0_10] : memref<2x3xf32, #tpu.memory_space<vmem>>, vector<2x3xf32>
    tpu.vector_store %arg3[%c0_9, %c0_10], %10 {strides = array<i32>} : memref<2x3xf32, #tpu.memory_space<vmem>>, vector<2x3xf32>,
    return
  }
}

</mosaic_0001>

<llo_original>
// kernel: tpu_custom_call.1
$region0: #{tpu_custom_call.1}
  #allocation0 [shape = 'u32[]', space=smem, size = 0x4, offset = 0x4, fixed_abs, tag = 'smem constant byte address 0x4 - core index']
  #allocation1 [shape = 'u32[72,128]{1,0:T(1,128)}', space=vmem, size = 0x9000, scoped, tag = 'internal scratch']
  %s0 = inlined_call_operand.hbm [shape: f32[2,1024], index: 0, kind: input, shape index: {}]
  %s1 = inlined_call_operand.hbm [shape: f32[3,3,1024], index: 1, kind: input, shape index: {}]
  %s2 = inlined_call_operand.hbm [shape: f32[3,3], index: 2, kind: input, shape index: {}]
  %s3 = inlined_call_operand.hbm [shape: f32[2,3], index: 3, kind: output, shape index: {}]
  %s4 = sld [smem:[#allocation0]]
  $region34: #{tpu_custom_call.1} parent=0
    _
  %s6 = ssub.s32 1, %s4
  %s7 = scalar_select 0, %s6, %s4
  $region1: #{tpu_custom_call.1} parent=0
    #allocation2 [shape = 'u8[8192]{0}', space=vmem, size = 0x2000, scoped, tag = 'input window, operand 0, single buffered']
    #allocation3 [shape = 's32[1]{0}', space=sflag, size = 0x4, scoped, tag = 'scoped memory for tpu_custom_call.1']
    #allocation4 [shape = 's32[1]{0}', space=sflag, size = 0x4, scoped, tag = 'scoped memory for tpu_custom_call.1']
    #allocation5 [shape = 'u8[49152]{0}', space=vmem, size = 0xc000, scoped, tag = 'input window, operand 1, single buffered']
    #allocation6 [shape = 's32[1]{0}', space=sflag, size = 0x4, scoped, tag = 'scoped memory for tpu_custom_call.1']
    #allocation7 [shape = 'u8[2048]{0}', space=vmem, size = 0x800, scoped, tag = 'input window, operand 2, single buffered']
    #allocation8 [shape = 'u8[1024]{0}', space=vmem, size = 0x400, scoped, tag = 'output window, operand 0, single buffered']
    %8 = vsyncpa [#allocation3], 0
    %9 = vsyncpa [#allocation6], 0
    %10 = vsyncpa [#allocation4], 0
    // Predicated region
    $region2: #{tpu_custom_call.1} parent=1 // pred_check
      _
    $region3: #{tpu_custom_call.1} parent=1 // pred_check_branch
      %12 = sbr.rel (0) target = $region5
    $region4: #{tpu_custom_call.1} parent=1 // pred_region
      %14 = vsyncadd [#allocation3], 0
      %s16 = sshll.u32 %s0, 4
      %s17 = int_to_ptr.hbm [resolvable:$true] %s16
      %s18 = sshll.u32 [#allocation2], 4
      %s19 = int_to_ptr.vmem [resolvable:$true] %s18
      %21 = dma.hbm_to_vmem [thread:$0]  %s17, 256, %s19, [#allocation3]
    $region5: #{tpu_custom_call.1} parent=1 // pred_fallthru
      _
    // Predicated region
    $region6: #{tpu_custom_call.1} parent=1 // pred_check
      _
    $region7: #{tpu_custom_call.1} parent=1 // pred_check_branch
      %23 = sbr.rel (0) target = $region9
    $region8: #{tpu_custom_call.1} parent=1 // pred_region
      %25 = vsyncadd [#allocation6], 0
      %s26 = sshll.u32 %s1, 4
      %s27 = int_to_ptr.hbm [resolvable:$true] %s26
      %s28 = sshll.u32 [#allocation5], 4
      %s29 = int_to_ptr.vmem [resolvable:$true] %s28
      %34 = dma.hbm_to_vmem [thread:$0]  %s27, 1536, %s29, [#allocation6], 512, 512, 32
    $region9: #{tpu_custom_call.1} parent=1 // pred_fallthru
      _
    // Predicated region
    $region10: #{tpu_custom_call.1} parent=1 // pred_check
      _
    $region11: #{tpu_custom_call.1} parent=1 // pred_check_branch
      %36 = sbr.rel (0) target = $region13
    $region12: #{tpu_custom_call.1} parent=1 // pred_region
      %38 = vsyncadd [#allocation6], 0
      %s40 = sshll.u32 %s2, 4
      %s41 = int_to_ptr.hbm [resolvable:$true] %s40
      %s42 = sshll.u32 [#allocation7], 4
      %s43 = int_to_ptr.vmem [resolvable:$true] %s42
      %45 = dma.hbm_to_vmem [thread:$0]  %s41, 64, %s43, [#allocation6]
    $region13: #{tpu_custom_call.1} parent=1 // pred_fallthru
      _
    // Predicated region
    $region14: #{tpu_custom_call.1} parent=1 // pred_check
      _
    $region15: #{tpu_custom_call.1} parent=1 // pred_check_branch
      %47 = sbr.rel (0) target = $region17
    $region16: #{tpu_custom_call.1} parent=1 // pred_region
      %49 = dma.done [#allocation3], 256
    $region17: #{tpu_custom_call.1} parent=1 // pred_fallthru
      _
    // Predicated region
    $region18: #{tpu_custom_call.1} parent=1 // pred_check
      _
    $region19: #{tpu_custom_call.1} parent=1 // pred_check_branch
      %51 = sbr.rel (0) target = $region21
    $region20: #{tpu_custom_call.1} parent=1 // pred_region
      %53 = dma.done [#allocation6], 1536
    $region21: #{tpu_custom_call.1} parent=1 // pred_fallthru
      _
    // Predicated region
    $region22: #{tpu_custom_call.1} parent=1 // pred_check
      _
    $region23: #{tpu_custom_call.1} parent=1 // pred_check_branch
      %55 = sbr.rel (0) target = $region25
    $region24: #{tpu_custom_call.1} parent=1 // pred_region
      %57 = dma.done [#allocation6], 64
    $region25: #{tpu_custom_call.1} parent=1 // pred_fallthru
      _
    %v58 = vld [vmem:[#allocation5] sm:$0x77]
    %v59 = vld [vmem:[#allocation5 + $0x8] sm:$0x77]
    %v60 = vld [vmem:[#allocation5 + $0x10] sm:$0x77]
    %v61 = vld [vmem:[#allocation5 + $0x18] sm:$0x77]
    %v62 = vld [vmem:[#allocation5 + $0x20] sm:$0x77]
    %v63 = vld [vmem:[#allocation5 + $0x28] sm:$0x77]
    %v64 = vld [vmem:[#allocation5 + $0x30] sm:$0x77]
    %v65 = vld [vmem:[#allocation5 + $0x38] sm:$0x77]
    %v66 = vld [vmem:[#allocation5 + $0x40] sm:$0x77]
    %v67 = vld [vmem:[#allocation5 + $0x48] sm:$0x77]
    %v68 = vld [vmem:[#allocation5 + $0x50] sm:$0x77]
    %v69 = vld [vmem:[#allocation5 + $0x58] sm:$0x77]
    %82 = vst [vmem:[#allocation1] ss:$2 sm:$0xff] %v58
    %s83 = scalar_lea.vmem [#allocation1], 16
    %84 = vst [vmem:[%s83] ss:$2 sm:$0xff] %v59
    %s85 = scalar_lea.vmem [#allocation1], 32
    %86 = vst [vmem:[%s85] ss:$2 sm:$0xff] %v60
    %s87 = scalar_lea.vmem [#allocation1], 48
    %88 = vst [vmem:[%s87] ss:$2 sm:$0xff] %v61
    %v89 = vld.sshfl [vmem:[#allocation1] sm:$0xff pattern:$0x75316420]
    %v90 = vld.sshfl [vmem:[#allocation1 + $0x8] sm:$0xff pattern:$0x75316420]
    %v91 = vld.sshfl [vmem:[#allocation1 + $0x10] sm:$0xff pattern:$0x75316420]
    %v92 = vld.sshfl [vmem:[#allocation1 + $0x18] sm:$0xff pattern:$0x75316420]
    %v93 = vld.sshfl [vmem:[#allocation1 + $0x20] sm:$0xff pattern:$0x75316420]
    %v94 = vld.sshfl [vmem:[#allocation1 + $0x28] sm:$0xff pattern:$0x75316420]
    %v95 = vld.sshfl [vmem:[#allocation1 + $0x30] sm:$0xff pattern:$0x75316420]
    %v96 = vld.sshfl [vmem:[#allocation1 + $0x38] sm:$0xff pattern:$0x75316420]
    %97 = vst [vmem:[#allocation1] ss:$2 sm:$0xff] %v62
    %98 = vst [vmem:[%s83] ss:$2 sm:$0xff] %v63
    %99 = vst [vmem:[%s85] ss:$2 sm:$0xff] %v64
    %100 = vst [vmem:[%s87] ss:$2 sm:$0xff] %v65
    %v101 = vld.sshfl [vmem:[#allocation1] sm:$0xff pattern:$0x75316420]
    %v102 = vld.sshfl [vmem:[#allocation1 + $0x8] sm:$0xff pattern:$0x75316420]
    %v103 = vld.sshfl [vmem:[#allocation1 + $0x10] sm:$0xff pattern:$0x75316420]
    %v104 = vld.sshfl [vmem:[#allocation1 + $0x18] sm:$0xff pattern:$0x75316420]
    %v105 = vld.sshfl [vmem:[#allocation1 + $0x20] sm:$0xff pattern:$0x75316420]
    %v106 = vld.sshfl [vmem:[#allocation1 + $0x28] sm:$0xff pattern:$0x75316420]
    %v107 = vld.sshfl [vmem:[#allocation1 + $0x30] sm:$0xff pattern:$0x75316420]
    %v108 = vld.sshfl [vmem:[#allocation1 + $0x38] sm:$0xff pattern:$0x75316420]
    %109 = vst [vmem:[#allocation1] ss:$2 sm:$0xff] %v66
    %110 = vst [vmem:[%s83] ss:$2 sm:$0xff] %v67
    %111 = vst [vmem:[%s85] ss:$2 sm:$0xff] %v68
    %112 = vst [vmem:[%s87] ss:$2 sm:$0xff] %v69
    %v113 = vld.sshfl [vmem:[#allocation1] sm:$0xff pattern:$0x75316420]
    %v114 = vld.sshfl [vmem:[#allocation1 + $0x8] sm:$0xff pattern:$0x75316420]
    %v115 = vld.sshfl [vmem:[#allocation1 + $0x10] sm:$0xff pattern:$0x75316420]
    %v116 = vld.sshfl [vmem:[#allocation1 + $0x18] sm:$0xff pattern:$0x75316420]
    %v117 = vld.sshfl [vmem:[#allocation1 + $0x20] sm:$0xff pattern:$0x75316420]
    %v118 = vld.sshfl [vmem:[#allocation1 + $0x28] sm:$0xff pattern:$0x75316420]
    %v119 = vld.sshfl [vmem:[#allocation1 + $0x30] sm:$0xff pattern:$0x75316420]
    %v120 = vld.sshfl [vmem:[#allocation1 + $0x38] sm:$0xff pattern:$0x75316420]
    %vm145 = vcmask 1042432
    %v146 = vsel %vm145, %v89, 0.0
    %v147 = vsel %vm145, %v101, 0.0
    %v148 = vadd.f32 %v146, %v147
    %v149 = vsel %vm145, %v113, 0.0
    %v150 = vadd.f32 %v148, %v149
    %v151 = vsel %vm145, %v90, 0.0
    %v152 = vsel %vm145, %v102, 0.0
    %v153 = vadd.f32 %v151, %v152
    %v154 = vsel %vm145, %v114, 0.0
    %v155 = vadd.f32 %v153, %v154
    %v156 = vsel %vm145, %v91, 0.0
    %v157 = vsel %vm145, %v103, 0.0
    %v158 = vadd.f32 %v156, %v157
    %v159 = vsel %vm145, %v115, 0.0
    %v160 = vadd.f32 %v158, %v159
    %v161 = vsel %vm145, %v92, 0.0
    %v162 = vsel %vm145, %v104, 0.0
    %v163 = vadd.f32 %v161, %v162
    %v164 = vsel %vm145, %v116, 0.0
    %v165 = vadd.f32 %v163, %v164
    %v166 = vsel %vm145, %v93, 0.0
    %v167 = vsel %vm145, %v105, 0.0
    %v168 = vadd.f32 %v166, %v167
    %v169 = vsel %vm145, %v117, 0.0
    %v170 = vadd.f32 %v168, %v169
    %v171 = vsel %vm145, %v94, 0.0
    %v172 = vsel %vm145, %v106, 0.0
    %v173 = vadd.f32 %v171, %v172
    %v174 = vsel %vm145, %v118, 0.0
    %v175 = vadd.f32 %v173, %v174
    %v176 = vsel %vm145, %v95, 0.0
    %v177 = vsel %vm145, %v107, 0.0
    %v178 = vadd.f32 %v176, %v177
    %v179 = vsel %vm145, %v119, 0.0
    %v180 = vadd.f32 %v178, %v179
    %v181 = vsel %vm145, %v96, 0.0
    %v182 = vsel %vm145, %v108, 0.0
    %v183 = vadd.f32 %v181, %v182
    %v184 = vsel %vm145, %v120, 0.0
    %v185 = vadd.f32 %v183, %v184
    %v186 = vld [vmem:[#allocation7] sm:$0x7]
    %vm187 = vcmask 18432
    %v188 = vsel %vm187, %v186, 0.0
    %v189 = vrot.slane %v188, 4
    %v190 = vadd.f32 %v188, %v189
    %v191 = vrot.slane %v190, 2
    %v192 = vadd.f32 %v190, %v191
    %v193 = vrot.slane %v192, 1
    %v194 = vadd.f32 %v192, %v193
    %v195 = vld [vmem:[#allocation2] sm:$0xff]
    %v196 = vld [vmem:[#allocation2 + $0x8] sm:$0xff]
    %199 = vst [vmem:[#allocation1] ss:$4 sm:$0xff] %v195
    %s200 = scalar_lea.vmem [#allocation1], 32
    %201 = vst [vmem:[%s200] ss:$4 sm:$0xff] %v196
    %v202 = vld.sshfl [vmem:[#allocation1] sm:$0xff pattern:$0x73625140]
    %v203 = vld.sshfl [vmem:[#allocation1 + $0x8] sm:$0xff pattern:$0x73625140]
    %v204 = vld.sshfl [vmem:[#allocation1 + $0x10] sm:$0xff pattern:$0x73625140]
    %v205 = vld.sshfl [vmem:[#allocation1 + $0x18] sm:$0xff pattern:$0x73625140]
    %v206 = vld.sshfl [vmem:[#allocation1 + $0x20] sm:$0xff pattern:$0x73625140]
    %v207 = vld.sshfl [vmem:[#allocation1 + $0x28] sm:$0xff pattern:$0x73625140]
    %v208 = vld.sshfl [vmem:[#allocation1 + $0x30] sm:$0xff pattern:$0x73625140]
    %v209 = vld.sshfl [vmem:[#allocation1 + $0x38] sm:$0xff pattern:$0x73625140]
    %218 = vmatpush.xpose.msra.mxu0 0.0
    %219 = vmatpush.xpose.msra.mxu0 0.0
    %220 = vmatpush.xpose.msra.mxu0 0.0
    %221 = vmatpush.xpose.msra.mxu0 0.0
    %222 = vmatpush.xpose.msra.mxu0 0.0
    %223 = vmatpush.xpose.msra.mxu0 0.0
    %224 = vmatpush.xpose.msra.mxu0 0.0
    %225 = vmatpush.xpose.msra.mxu0 0.0
    %226 = vmatpush.xpose.msra.mxu0 0.0
    %227 = vmatpush.xpose.msra.mxu0 0.0
    %228 = vmatpush.xpose.msra.mxu0 0.0
    %229 = vmatpush.xpose.msra.mxu0 0.0
    %230 = vmatpush.xpose.msra.mxu0 0.0
    %231 = vmatpush.xpose.msra.mxu0 0.0
    %232 = vmatpush.xpose.msra.mxu0 0.0
    %233 = vmatpush.xpose.msra.mxu0 %v150
    %234 = vmatmul.f32.gmra.mxu0 %v202
    %v235 = vpop.f32.mrf.mxu0
    %v236 = vadd.f32 %v194, %v235
    %237 = vdwg.mxu0
    %238 = vmatpush.xpose.msra.mxu0 0.0
    %239 = vmatpush.xpose.msra.mxu0 0.0
    %240 = vmatpush.xpose.msra.mxu0 0.0
    %241 = vmatpush.xpose.msra.mxu0 0.0
    %242 = vmatpush.xpose.msra.mxu0 0.0
    %243 = vmatpush.xpose.msra.mxu0 0.0
    %244 = vmatpush.xpose.msra.mxu0 0.0
    %245 = vmatpush.xpose.msra.mxu0 0.0
    %246 = vmatpush.xpose.msra.mxu0 0.0
    %247 = vmatpush.xpose.msra.mxu0 0.0
    %248 = vmatpush.xpose.msra.mxu0 0.0
    %249 = vmatpush.xpose.msra.mxu0 0.0
    %250 = vmatpush.xpose.msra.mxu0 0.0
    %251 = vmatpush.xpose.msra.mxu0 0.0
    %252 = vmatpush.xpose.msra.mxu0 0.0
    %253 = vmatpush.xpose.msra.mxu0 %v155
    %254 = vmatmul.f32.gmra.mxu0 %v203
    %v255 = vpop.f32.mrf.mxu0
    %v256 = vadd.f32 %v236, %v255
    %257 = vdwg.mxu0
    %258 = vmatpush.xpose.msra.mxu0 0.0
    %259 = vmatpush.xpose.msra.mxu0 0.0
    %260 = vmatpush.xpose.msra.mxu0 0.0
    %261 = vmatpush.xpose.msra.mxu0 0.0
    %262 = vmatpush.xpose.msra.mxu0 0.0
    %263 = vmatpush.xpose.msra.mxu0 0.0
    %264 = vmatpush.xpose.msra.mxu0 0.0
    %265 = vmatpush.xpose.msra.mxu0 0.0
    %266 = vmatpush.xpose.msra.mxu0 0.0
    %267 = vmatpush.xpose.msra.mxu0 0.0
    %268 = vmatpush.xpose.msra.mxu0 0.0
    %269 = vmatpush.xpose.msra.mxu0 0.0
    %270 = vmatpush.xpose.msra.mxu0 0.0
    %271 = vmatpush.xpose.msra.mxu0 0.0
    %272 = vmatpush.xpose.msra.mxu0 0.0
    %273 = vmatpush.xpose.msra.mxu0 %v160
    %274 = vmatmul.f32.gmra.mxu0 %v204
    %v275 = vpop.f32.mrf.mxu0
    %v276 = vadd.f32 %v256, %v275
    %277 = vdwg.mxu0
    %278 = vmatpush.xpose.msra.mxu0 0.0
    %279 = vmatpush.xpose.msra.mxu0 0.0
    %280 = vmatpush.xpose.msra.mxu0 0.0
    %281 = vmatpush.xpose.msra.mxu0 0.0
    %282 = vmatpush.xpose.msra.mxu0 0.0
    %283 = vmatpush.xpose.msra.mxu0 0.0
    %284 = vmatpush.xpose.msra.mxu0 0.0
    %285 = vmatpush.xpose.msra.mxu0 0.0
    %286 = vmatpush.xpose.msra.mxu0 0.0
    %287 = vmatpush.xpose.msra.mxu0 0.0
    %288 = vmatpush.xpose.msra.mxu0 0.0
    %289 = vmatpush.xpose.msra.mxu0 0.0
    %290 = vmatpush.xpose.msra.mxu0 0.0
    %291 = vmatpush.xpose.msra.mxu0 0.0
    %292 = vmatpush.xpose.msra.mxu0 0.0
    %293 = vmatpush.xpose.msra.mxu0 %v165
    %294 = vmatmul.f32.gmra.mxu0 %v205
    %v295 = vpop.f32.mrf.mxu0
    %v296 = vadd.f32 %v276, %v295
    %297 = vdwg.mxu0
    %298 = vmatpush.xpose.msra.mxu0 0.0
    %299 = vmatpush.xpose.msra.mxu0 0.0
    %300 = vmatpush.xpose.msra.mxu0 0.0
    %301 = vmatpush.xpose.msra.mxu0 0.0
    %302 = vmatpush.xpose.msra.mxu0 0.0
    %303 = vmatpush.xpose.msra.mxu0 0.0
    %304 = vmatpush.xpose.msra.mxu0 0.0
    %305 = vmatpush.xpose.msra.mxu0 0.0
    %306 = vmatpush.xpose.msra.mxu0 0.0
    %307 = vmatpush.xpose.msra.mxu0 0.0
    %308 = vmatpush.xpose.msra.mxu0 0.0
    %309 = vmatpush.xpose.msra.mxu0 0.0
    %310 = vmatpush.xpose.msra.mxu0 0.0
    %311 = vmatpush.xpose.msra.mxu0 0.0
    %312 = vmatpush.xpose.msra.mxu0 0.0
    %313 = vmatpush.xpose.msra.mxu0 %v170
    %314 = vmatmul.f32.gmra.mxu0 %v206
    %v315 = vpop.f32.mrf.mxu0
    %v316 = vadd.f32 %v296, %v315
    %317 = vdwg.mxu0
    %318 = vmatpush.xpose.msra.mxu0 0.0
    %319 = vmatpush.xpose.msra.mxu0 0.0
    %320 = vmatpush.xpose.msra.mxu0 0.0
    %321 = vmatpush.xpose.msra.mxu0 0.0
    %322 = vmatpush.xpose.msra.mxu0 0.0
    %323 = vmatpush.xpose.msra.mxu0 0.0
    %324 = vmatpush.xpose.msra.mxu0 0.0
    %325 = vmatpush.xpose.msra.mxu0 0.0
    %326 = vmatpush.xpose.msra.mxu0 0.0
    %327 = vmatpush.xpose.msra.mxu0 0.0
    %328 = vmatpush.xpose.msra.mxu0 0.0
    %329 = vmatpush.xpose.msra.mxu0 0.0
    %330 = vmatpush.xpose.msra.mxu0 0.0
    %331 = vmatpush.xpose.msra.mxu0 0.0
    %332 = vmatpush.xpose.msra.mxu0 0.0
    %333 = vmatpush.xpose.msra.mxu0 %v175
    %334 = vmatmul.f32.gmra.mxu0 %v207
    %v335 = vpop.f32.mrf.mxu0
    %v336 = vadd.f32 %v316, %v335
    %337 = vdwg.mxu0
    %338 = vmatpush.xpose.msra.mxu0 0.0
    %339 = vmatpush.xpose.msra.mxu0 0.0
    %340 = vmatpush.xpose.msra.mxu0 0.0
    %341 = vmatpush.xpose.msra.mxu0 0.0
    %342 = vmatpush.xpose.msra.mxu0 0.0
    %343 = vmatpush.xpose.msra.mxu0 0.0
    %344 = vmatpush.xpose.msra.mxu0 0.0
    %345 = vmatpush.xpose.msra.mxu0 0.0
    %346 = vmatpush.xpose.msra.mxu0 0.0
    %347 = vmatpush.xpose.msra.mxu0 0.0
    %348 = vmatpush.xpose.msra.mxu0 0.0
    %349 = vmatpush.xpose.msra.mxu0 0.0
    %350 = vmatpush.xpose.msra.mxu0 0.0
    %351 = vmatpush.xpose.msra.mxu0 0.0
    %352 = vmatpush.xpose.msra.mxu0 0.0
    %353 = vmatpush.xpose.msra.mxu0 %v180
    %354 = vmatmul.f32.gmra.mxu0 %v208
    %v355 = vpop.f32.mrf.mxu0
    %v356 = vadd.f32 %v336, %v355
    %357 = vdwg.mxu0
    %358 = vmatpush.xpose.msra.mxu0 0.0
    %359 = vmatpush.xpose.msra.mxu0 0.0
    %360 = vmatpush.xpose.msra.mxu0 0.0
    %361 = vmatpush.xpose.msra.mxu0 0.0
    %362 = vmatpush.xpose.msra.mxu0 0.0
    %363 = vmatpush.xpose.msra.mxu0 0.0
    %364 = vmatpush.xpose.msra.mxu0 0.0
    %365 = vmatpush.xpose.msra.mxu0 0.0
    %366 = vmatpush.xpose.msra.mxu0 0.0
    %367 = vmatpush.xpose.msra.mxu0 0.0
    %368 = vmatpush.xpose.msra.mxu0 0.0
    %369 = vmatpush.xpose.msra.mxu0 0.0
    %370 = vmatpush.xpose.msra.mxu0 0.0
    %371 = vmatpush.xpose.msra.mxu0 0.0
    %372 = vmatpush.xpose.msra.mxu0 0.0
    %373 = vmatpush.xpose.msra.mxu0 %v185
    %374 = vmatmul.f32.gmra.mxu0 %v209
    %v375 = vpop.f32.mrf.mxu0
    %v376 = vadd.f32 %v356, %v375
    %377 = vdwg.mxu0
    %v378 = vmul.f32 %v376, 0.33333334
    %vm379 = vcmask 17408
    %380 = vst.msk [vmem:[#allocation8] sm:$0x3] %vm379, %v378
    // Predicated region
    $region26: #{tpu_custom_call.1} parent=1 // pred_check
      _
    $region27: #{tpu_custom_call.1} parent=1 // pred_check_branch
      %382 = sbr.rel (0) target = $region29
    $region28: #{tpu_custom_call.1} parent=1 // pred_region
      %384 = vsyncadd [#allocation4], 0
      %s386 = sshll.u32 [#allocation8], 4
      %s387 = int_to_ptr.vmem [resolvable:$true] %s386
      %s388 = sshll.u32 %s3, 4
      %s389 = int_to_ptr.hbm [resolvable:$true] %s388
      %391 = dma.vmem_to_hbm [thread:$0]  %s387, 32, %s389, [#allocation4]
    $region29: #{tpu_custom_call.1} parent=1 // pred_fallthru
      _
    // Predicated region
    $region30: #{tpu_custom_call.1} parent=1 // pred_check
      _
    $region31: #{tpu_custom_call.1} parent=1 // pred_check_branch
      %393 = sbr.rel (0) target = $region33
    $region32: #{tpu_custom_call.1} parent=1 // pred_region
      %395 = dma.done [#allocation4], 32
    $region33: #{tpu_custom_call.1} parent=1 // pred_fallthru
      _
    %396 = vsyncpa [#allocation3], 1
    %397 = vsyncpa [#allocation6], 1
    %398 = vsyncpa [#allocation4], 1

</llo_original>
